<compile_context>
chip_gen: v5e
topology: v5e:2x2
jax: 0.10.0
libtpu: 0.0.40
codegen_flags: <defaults>
</compile_context>

<pallas_src>
import jax
import jax.numpy as jnp
from jax import lax
from jax.experimental import pallas as pl
from jax.experimental.pallas import tpu as pltpu

NEG_SLOPE = 0.01  # nn.LeakyReLU default


def _leaky_relu(x):
    return jnp.where(x > 0, x, NEG_SLOPE * x)


def _round_up(n, m):
    return ((n + m - 1) // m) * m


def gaze_mlp_kernel(x_ref, w1_ref, b1_ref, w2_ref, b2_ref, w3t_ref, b3t_ref, o_ref):
    # fc1 + LeakyReLU  (bf16 MXU inputs, f32 accumulation / f32 epilogue)
    h = jnp.dot(x_ref[...], w1_ref[...], preferred_element_type=jnp.float32)
    h = _leaky_relu(h + b1_ref[...])
    # hidden1 + LeakyReLU
    h = jnp.dot(h.astype(w2_ref.dtype), w2_ref[...],
                preferred_element_type=jnp.float32)
    h = _leaky_relu(h + b2_ref[...])
    # fc2, computed transposed:  (F3, F2) . (blk, F2)^T -> (F3, blk)
    # (lane-dense over batch; avoids writing a 2->128 zero-padded output slab)
    o = lax.dot_general(
        w3t_ref[...], h.astype(w3t_ref.dtype),
        dimension_numbers=(((1,), (1,)), ((), ())),
        preferred_element_type=jnp.float32)
    o_ref[...] = (o + b3t_ref[...]).astype(o_ref.dtype)


def pack_params(params):
    """One-time packing: bf16 weights ([in, out]; last layer also transposed),
    f32 biases shaped for in-kernel broadcast.  Do NOT call per forward."""
    return {
        "w1": params["w1"].astype(jnp.bfloat16),          # (F0, F1)
        "b1": params["b1"].reshape(1, -1),                 # (1, F1)  f32
        "w2": params["w2"].astype(jnp.bfloat16),           # (F1, F2)
        "b2": params["b2"].reshape(1, -1),                 # (1, F2)  f32
        "w3t": params["w3"].T.astype(jnp.bfloat16),        # (F3, F2)
        "b3t": params["b3"].reshape(-1, 1),                # (F3, 1)  f32
    }


def _pick_batch_tile(B, block_b):
    """Multiple-of-128 batch tile, minimal padding, >=2 grid steps when free."""
    blk = min(block_b, _round_up(B, 128))
    # If a single tile would cover the whole (padded) batch and it splits
    # evenly, halve it so the grid has 2 steps (v7x megacore sharding) at no
    # extra padding cost.  v5e/v6e (1 TC) are unaffected.
    if blk == _round_up(B, 128) and blk % 256 == 0:
        blk //= 2
    Bp = _round_up(B, blk)
    return blk, Bp


def gaze_predictor_forward(x, packed, *, block_b=1024, compute_dtype=jnp.bfloat16):
    """x: [B, F0] float32.  packed: output of pack_params().  Returns [B, F3] f32."""
    w1, b1 = packed["w1"], packed["b1"]
    w2, b2 = packed["w2"], packed["b2"]
    w3t, b3t = packed["w3t"], packed["b3t"]

    B, F0 = x.shape
    F1 = w1.shape[1]
    F2 = w2.shape[1]
    F3 = w3t.shape[0]

    blk, Bp = _pick_batch_tile(B, block_b)

    # Cast first (halves the pad/copy bytes), then pad the batch dim only.
    xc = x.astype(compute_dtype)
    if Bp != B:
        xc = jnp.pad(xc, ((0, Bp - B), (0, 0)))

    grid = (Bp // blk,)
    const = lambda i: (0, 0)  # weights/biases stay VMEM-resident across steps

    flops = 2 * Bp * (F0 * F1 + F1 * F2 + F2 * F3)
    bytes_accessed = int(
        Bp * F0 * xc.dtype.itemsize                      # x read once (bf16)
        + (w1.size + w2.size + w3t.size) * 2             # weights read once
        + (b1.size + b2.size + b3t.size) * 4             # biases read once
        + F3 * Bp * 4                                    # transposed f32 output
    )

    out_t = pl.pallas_call(
        gaze_mlp_kernel,
        out_shape=jax.ShapeDtypeStruct((F3, Bp), jnp.float32),
        grid_spec=pltpu.PrefetchScalarGridSpec(
            num_scalar_prefetch=0,
            grid=grid,
            in_specs=[
                pl.BlockSpec((blk, F0), lambda i: (i, 0)),  # x tile over batch
                pl.BlockSpec((F0, F1), const),
                pl.BlockSpec((1, F1), const),
                pl.BlockSpec((F1, F2), const),
                pl.BlockSpec((1, F2), const),
                pl.BlockSpec((F3, F2), const),
                pl.BlockSpec((F3, 1), const),
            ],
            out_specs=pl.BlockSpec((F3, blk), lambda i: (0, i)),
        ),
        compiler_params=pltpu.CompilerParams(
            dimension_semantics=("parallel",),
        ),
        cost_estimate=pl.CostEstimate(
            flops=flops, transcendentals=0, bytes_accessed=bytes_accessed),
    )(xc, w1, b1, w2, b2, w3t, b3t)

    # Untranspose (tiny: F3 x Bp) and strip batch padding.
    return out_t.T[:B, :]


def init_params(key, arch):
    """Deterministic init matching PyTorch nn.Linear defaults.
    arch = [168, 256, 64, 2] -> fc1, hidden1, fc2."""
    assert len(arch) == 4, "this script implements the canonical [in, h1, h2, out] arch"
    keys = jax.random.split(key, 6)

    def linear(kw, kb, fan_in, fan_out):
        bound = 1.0 / jnp.sqrt(jnp.float32(fan_in))
        w = jax.random.uniform(kw, (fan_in, fan_out), jnp.float32, -bound, bound)
        b = jax.random.uniform(kb, (1, fan_out), jnp.float32, -bound, bound)
        return w, b

    w1, b1 = linear(keys[0], keys[1], arch[0], arch[1])
    w2, b2 = linear(keys[2], keys[3], arch[1], arch[2])
    w3, b3 = linear(keys[4], keys[5], arch[2], arch[3])
    return {"w1": w1, "b1": b1, "w2": w2, "b2": b2, "w3": w3, "b3": b3}


def reference_forward(x, p):
    h = _leaky_relu(x @ p["w1"] + p["b1"])
    h = _leaky_relu(h @ p["w2"] + p["b2"])
    return h @ p["w3"] + p["b3"]


if __name__ == "__main__":
    # TODO(synk): self.scaler (sklearn StandardScaler), Adam optimizer and the
    # pickle save/load helpers are training/IO-side and not part of forward().
    arch = [168, 256, 64, 2]  # GazePredictor([168, 256, 64, 2])
    batch = 8                 # arbitrary batch; wrapper pads to the tile size

    key = jax.random.PRNGKey(0)
    kx, kp = jax.random.split(key)
    x = jax.random.normal(kx, (batch, arch[0]), jnp.float32)
    params = init_params(kp, arch)
    packed = jax.tree_util.tree_map(jax.block_until_ready, pack_params(params))

    out = gaze_predictor_forward(x, packed)
    out = jax.block_until_ready(out)

    ref = reference_forward(x, params)  # f32 reference
    assert out.shape == (batch, arch[-1])
    # bf16 MXU inputs with f32 accumulation -> ~1e-2-level agreement vs f32 ref
    assert jnp.allclose(out, ref, atol=5e-2, rtol=5e-2), "mismatch vs. JAX reference"

    print("KERNEL_OK")
</pallas_src>

<mosaic_0001>
module attributes {stable_mosaic.version = 11 : i64} {
  func.func @gaze_mlp_kernel(%arg0: i32, %arg1: memref<128x168xbf16, #tpu.memory_space<vmem>>, %arg2: memref<168x256xbf16, #tpu.memory_space<vmem>>, %arg3: memref<1x256xf32, #tpu.memory_space<vmem>>, %arg4: memref<256x64xbf16, #tpu.memory_space<vmem>>, %arg5: memref<1x64xf32, #tpu.memory_space<vmem>>, %arg6: memref<2x64xbf16, #tpu.memory_space<vmem>>, %arg7: memref<2x1xf32, #tpu.memory_space<vmem>>, %arg8: memref<2x128xf32, #tpu.memory_space<vmem>>) attributes {dimension_semantics = [#tpu.dimension_semantics<parallel>], iteration_bounds = array<i64: 1>, scalar_prefetch = 0 : i64, scratch_operands = 0 : i64, tpu.core_type = #tpu.core_type<tc>, window_params = [{transform_indices = @transform_0, window_bounds = array<i64: 128, 168>}, {pipeline_mode = #tpu.pipeline_mode<synchronous>, transform_indices = @transform_1, window_bounds = array<i64: 168, 256>}, {pipeline_mode = #tpu.pipeline_mode<synchronous>, transform_indices = @transform_2, window_bounds = array<i64: 1, 256>}, {pipeline_mode = #tpu.pipeline_mode<synchronous>, transform_indices = @transform_3, window_bounds = array<i64: 256, 64>}, {pipeline_mode = #tpu.pipeline_mode<synchronous>, transform_indices = @transform_4, window_bounds = array<i64: 1, 64>}, {pipeline_mode = #tpu.pipeline_mode<synchronous>, transform_indices = @transform_5, window_bounds = array<i64: 2, 64>}, {pipeline_mode = #tpu.pipeline_mode<synchronous>, transform_indices = @transform_6, window_bounds = array<i64: 2, 1>}, {transform_indices = @transform_7, window_bounds = array<i64: 2, 128>}]} {
    %c0 = arith.constant 0 : index
    %c0_0 = arith.constant 0 : index
    %0 = vector.load %arg1[%c0, %c0_0] : memref<128x168xbf16, #tpu.memory_space<vmem>>, vector<128x168xbf16>
    %c0_1 = arith.constant 0 : index
    %c0_2 = arith.constant 0 : index
    %1 = vector.load %arg2[%c0_1, %c0_2] : memref<168x256xbf16, #tpu.memory_space<vmem>>, vector<168x256xbf16>
    %cst = arith.constant dense<0.000000e+00> : vector<128x256xf32>
    %2 = tpu.matmul %0, %1, %cst {dimension_numbers = #tpu.dot_dimension_numbers<[1], [0], [0], [1], [0, 0, 1, 1], [], []>} : vector<128x168xbf16>, vector<168x256xbf16>, vector<128x256xf32> -> vector<128x256xf32>
    %c0_3 = arith.constant 0 : index
    %c0_4 = arith.constant 0 : index
    %3 = vector.load %arg3[%c0_3, %c0_4] : memref<1x256xf32, #tpu.memory_space<vmem>>, vector<1x256xf32>
    %4 = vector.broadcast %3 : vector<1x256xf32> to vector<128x256xf32>
    %5 = arith.addf %2, %4 : vector<128x256xf32>
    %cst_5 = arith.constant 0.000000e+00 : f32
    %6 = vector.broadcast %cst_5 : f32 to vector<128x256xf32>
    %7 = arith.cmpf ogt, %5, %6 : vector<128x256xf32>
    %cst_6 = arith.constant 0.00999999977 : f32
    %8 = vector.broadcast %cst_6 : f32 to vector<128x256xf32>
    %9 = arith.mulf %8, %5 : vector<128x256xf32>
    %10 = arith.select %7, %5, %9 : vector<128x256xi1>, vector<128x256xf32>
    %11 = arith.truncf %10 : vector<128x256xf32> to vector<128x256xbf16>
    %c0_7 = arith.constant 0 : index
    %c0_8 = arith.constant 0 : index
    %12 = vector.load %arg4[%c0_7, %c0_8] : memref<256x64xbf16, #tpu.memory_space<vmem>>, vector<256x64xbf16>
    %cst_9 = arith.constant dense<0.000000e+00> : vector<128x64xf32>
    %13 = tpu.matmul %11, %12, %cst_9 {dimension_numbers = #tpu.dot_dimension_numbers<[1], [0], [0], [1], [0, 0, 1, 1], [], []>} : vector<128x256xbf16>, vector<256x64xbf16>, vector<128x64xf32> -> vector<128x64xf32>
    %c0_10 = arith.constant 0 : index
    %c0_11 = arith.constant 0 : index
    %14 = vector.load %arg5[%c0_10, %c0_11] : memref<1x64xf32, #tpu.memory_space<vmem>>, vector<1x64xf32>
    %15 = vector.broadcast %14 : vector<1x64xf32> to vector<128x64xf32>
    %16 = arith.addf %13, %15 : vector<128x64xf32>
    %cst_12 = arith.constant 0.000000e+00 : f32
    %17 = vector.broadcast %cst_12 : f32 to vector<128x64xf32>
    %18 = arith.cmpf ogt, %16, %17 : vector<128x64xf32>
    %cst_13 = arith.constant 0.00999999977 : f32
    %19 = vector.broadcast %cst_13 : f32 to vector<128x64xf32>
    %20 = arith.mulf %19, %16 : vector<128x64xf32>
    %21 = arith.select %18, %16, %20 : vector<128x64xi1>, vector<128x64xf32>
    %c0_14 = arith.constant 0 : index
    %c0_15 = arith.constant 0 : index
    %22 = vector.load %arg6[%c0_14, %c0_15] : memref<2x64xbf16, #tpu.memory_space<vmem>>, vector<2x64xbf16>
    %23 = arith.truncf %21 : vector<128x64xf32> to vector<128x64xbf16>
    %cst_16 = arith.constant dense<0.000000e+00> : vector<2x128xf32>
    %24 = tpu.matmul %22, %23, %cst_16 {dimension_numbers = #tpu.dot_dimension_numbers<[1], [1], [0], [0], [0, 0, 1, 0], [], []>} : vector<2x64xbf16>, vector<128x64xbf16>, vector<2x128xf32> -> vector<2x128xf32>
    %c0_17 = arith.constant 0 : index
    %c0_18 = arith.constant 0 : index
    %25 = vector.load %arg7[%c0_17, %c0_18] : memref<2x1xf32, #tpu.memory_space<vmem>>, vector<2x1xf32>
    %26 = vector.broadcast %25 : vector<2x1xf32> to vector<2x128xf32>
    %27 = arith.addf %24, %26 : vector<2x128xf32>
    %c0_19 = arith.constant 0 : index
    %c0_20 = arith.constant 0 : index
    %28 = vector.load %arg8[%c0_19, %c0_20] : memref<2x128xf32, #tpu.memory_space<vmem>>, vector<2x128xf32>
    tpu.vector_store %arg8[%c0_19, %c0_20], %27 {strides = array<i32>} : memref<2x128xf32, #tpu.memory_space<vmem>>, vector<2x128xf32>,
    return
  }
  func.func @transform_0(%arg0: i32) -> (i32, i32) {
    %c0_i32 = arith.constant 0 : i32
    %c0_i32_0 = arith.constant 0 : i32
    return %arg0, %c0_i32 : i32, i32
  }
  func.func @transform_1(%arg0: i32) -> (i32, i32) {
    %c0_i32 = arith.constant 0 : i32
    %c0_i32_0 = arith.constant 0 : i32
    %c0_i32_1 = arith.constant 0 : i32
    return %c0_i32, %c0_i32_0 : i32, i32
  }
  func.func @transform_2(%arg0: i32) -> (i32, i32) {
    %c0_i32 = arith.constant 0 : i32
    %c0_i32_0 = arith.constant 0 : i32
    %c0_i32_1 = arith.constant 0 : i32
    return %c0_i32, %c0_i32_0 : i32, i32
  }
  func.func @transform_3(%arg0: i32) -> (i32, i32) {
    %c0_i32 = arith.constant 0 : i32
    %c0_i32_0 = arith.constant 0 : i32
    %c0_i32_1 = arith.constant 0 : i32
    return %c0_i32, %c0_i32_0 : i32, i32
  }
  func.func @transform_4(%arg0: i32) -> (i32, i32) {
    %c0_i32 = arith.constant 0 : i32
    %c0_i32_0 = arith.constant 0 : i32
    %c0_i32_1 = arith.constant 0 : i32
    return %c0_i32, %c0_i32_0 : i32, i32
  }
  func.func @transform_5(%arg0: i32) -> (i32, i32) {
    %c0_i32 = arith.constant 0 : i32
    %c0_i32_0 = arith.constant 0 : i32
    %c0_i32_1 = arith.constant 0 : i32
    return %c0_i32, %c0_i32_0 : i32, i32
  }
  func.func @transform_6(%arg0: i32) -> (i32, i32) {
    %c0_i32 = arith.constant 0 : i32
    %c0_i32_0 = arith.constant 0 : i32
    %c0_i32_1 = arith.constant 0 : i32
    return %c0_i32, %c0_i32_0 : i32, i32
  }
  func.func @transform_7(%arg0: i32) -> (i32, i32) {
    %c0_i32 = arith.constant 0 : i32
    %c0_i32_0 = arith.constant 0 : i32
    return %c0_i32, %arg0 : i32, i32
  }
}

</mosaic_0001>

<llo_original>
// kernel: tpu_custom_call.1
$region0: #{tpu_custom_call.1}
  #allocation0 [shape = 'u32[]', space=smem, size = 0x4, offset = 0x4, fixed_abs, tag = 'smem constant byte address 0x4 - core index']
  #allocation1 [shape = 'u32[72,128]{1,0:T(1,128)}', space=vmem, size = 0x9000, scoped, tag = 'internal scratch']
  %s0 = inlined_call_operand.vmem [shape: bf16[128,168], index: 0, kind: input, shape index: {}]
  %s1 = inlined_call_operand.vmem [shape: bf16[168,256], index: 1, kind: input, shape index: {}]
  %s2 = inlined_call_operand.vmem [shape: f32[1,256], index: 2, kind: input, shape index: {}]
  %s3 = inlined_call_operand.vmem [shape: bf16[256,64], index: 3, kind: input, shape index: {}]
  %s4 = inlined_call_operand.vmem [shape: f32[1,64], index: 4, kind: input, shape index: {}]
  %s5 = inlined_call_operand.vmem [shape: bf16[2,64], index: 5, kind: input, shape index: {}]
  %s6 = inlined_call_operand.vmem [shape: f32[2,1], index: 6, kind: input, shape index: {}]
  %s7 = inlined_call_operand.hbm [shape: f32[2,128], index: 7, kind: output, shape index: {}]
  %s8 = sld [smem:[#allocation0]]
  $region38: #{tpu_custom_call.1} parent=0
    _
  %s10 = ssub.s32 1, %s8
  %s11 = scalar_select 0, %s10, %s8
  $region1: #{tpu_custom_call.1} parent=0
    #allocation2 [shape = 'u8[1024]{0}', space=vmem, size = 0x400, scoped, tag = 'output window, operand 0, single buffered']
    #allocation3 [shape = 's32[1]{0}', space=sflag, size = 0x4, scoped, tag = 'scoped memory for tpu_custom_call.1']
    %12 = vsyncpa [#allocation3], 0
    // Predicated region
    $region2: #{tpu_custom_call.1} parent=1 // pred_check
      _
    $region3: #{tpu_custom_call.1} parent=1 // pred_check_branch
      %14 = sbr.rel (0) target = $region5
    $region4: #{tpu_custom_call.1} parent=1 // pred_region
      _
    $region5: #{tpu_custom_call.1} parent=1 // pred_fallthru
      _
    // Predicated region
    $region6: #{tpu_custom_call.1} parent=1 // pred_check
      _
    $region7: #{tpu_custom_call.1} parent=1 // pred_check_branch
      %16 = sbr.rel (0) target = $region9
    $region8: #{tpu_custom_call.1} parent=1 // pred_region
      _
    $region9: #{tpu_custom_call.1} parent=1 // pred_fallthru
      _
    // Predicated region
    $region10: #{tpu_custom_call.1} parent=1 // pred_check
      _
    $region11: #{tpu_custom_call.1} parent=1 // pred_check_branch
      %18 = sbr.rel (0) target = $region13
    $region12: #{tpu_custom_call.1} parent=1 // pred_region
      _
    $region13: #{tpu_custom_call.1} parent=1 // pred_fallthru
      _
    // Predicated region
    $region14: #{tpu_custom_call.1} parent=1 // pred_check
      _
    $region15: #{tpu_custom_call.1} parent=1 // pred_check_branch
      %20 = sbr.rel (0) target = $region17
    $region16: #{tpu_custom_call.1} parent=1 // pred_region
      _
    $region17: #{tpu_custom_call.1} parent=1 // pred_fallthru
      _
    // Predicated region
    $region18: #{tpu_custom_call.1} parent=1 // pred_check
      _
    $region19: #{tpu_custom_call.1} parent=1 // pred_check_branch
      %22 = sbr.rel (0) target = $region21
    $region20: #{tpu_custom_call.1} parent=1 // pred_region
      _
    $region21: #{tpu_custom_call.1} parent=1 // pred_fallthru
      _
    // Predicated region
    $region22: #{tpu_custom_call.1} parent=1 // pred_check
      _
    $region23: #{tpu_custom_call.1} parent=1 // pred_check_branch
      %24 = sbr.rel (0) target = $region25
    $region24: #{tpu_custom_call.1} parent=1 // pred_region
      _
    $region25: #{tpu_custom_call.1} parent=1 // pred_fallthru
      _
    // Predicated region
    $region26: #{tpu_custom_call.1} parent=1 // pred_check
      _
    $region27: #{tpu_custom_call.1} parent=1 // pred_check_branch
      %26 = sbr.rel (0) target = $region29
    $region28: #{tpu_custom_call.1} parent=1 // pred_region
      _
    $region29: #{tpu_custom_call.1} parent=1 // pred_fallthru
      _
    %v28 = vld [vmem:[%s0] sm:$0xff]
    %v29 = vld [vmem:[%s0 + $0x8] sm:$0xff]
    %v30 = vld [vmem:[%s0 + $0x10] sm:$0xff]
    %v31 = vld [vmem:[%s0 + $0x18] sm:$0xff]
    %v32 = vld [vmem:[%s0 + $0x20] sm:$0xff]
    %v33 = vld [vmem:[%s0 + $0x28] sm:$0xff]
    %v34 = vld [vmem:[%s0 + $0x30] sm:$0xff]
    %v35 = vld [vmem:[%s0 + $0x38] sm:$0xff]
    %v36 = vld [vmem:[%s0 + $0x40] sm:$0xff]
    %v37 = vld [vmem:[%s0 + $0x48] sm:$0xff]
    %v38 = vld [vmem:[%s0 + $0x50] sm:$0xff]
    %v39 = vld [vmem:[%s0 + $0x58] sm:$0xff]
    %v40 = vld [vmem:[%s0 + $0x60] sm:$0xff]
    %v41 = vld [vmem:[%s0 + $0x68] sm:$0xff]
    %v42 = vld [vmem:[%s0 + $0x70] sm:$0xff]
    %v43 = vld [vmem:[%s0 + $0x78] sm:$0xff]
    %v44 = vld [vmem:[%s1] sm:$0xff]
    %v45 = vld [vmem:[%s1 + $0x8] sm:$0xff]
    %v46 = vld [vmem:[%s1 + $0x10] sm:$0xff]
    %v47 = vld [vmem:[%s1 + $0x18] sm:$0xff]
    %v48 = vld [vmem:[%s1 + $0x20] sm:$0xff]
    %v49 = vld [vmem:[%s1 + $0x28] sm:$0xff]
    %v50 = vld [vmem:[%s1 + $0x30] sm:$0xff]
    %v51 = vld [vmem:[%s1 + $0x38] sm:$0xff]
    %v52 = vld [vmem:[%s1 + $0x40] sm:$0xff]
    %v53 = vld [vmem:[%s1 + $0x48] sm:$0xff]
    %v54 = vld [vmem:[%s1 + $0x50] sm:$0xff]
    %v55 = vld [vmem:[%s1 + $0x58] sm:$0xff]
    %v56 = vld [vmem:[%s1 + $0x60] sm:$0xff]
    %v57 = vld [vmem:[%s1 + $0x68] sm:$0xff]
    %v58 = vld [vmem:[%s1 + $0x70] sm:$0xff]
    %v59 = vld [vmem:[%s1 + $0x78] sm:$0xff]
    %v60 = vld [vmem:[%s1 + $0x80] sm:$0xff]
    %v61 = vld [vmem:[%s1 + $0x88] sm:$0xff]
    %v62 = vld [vmem:[%s1 + $0x90] sm:$0xff]
    %v63 = vld [vmem:[%s1 + $0x98] sm:$0xff]
    %v64 = vld [vmem:[%s1 + $0xa0] sm:$0xff]
    %v65 = vld [vmem:[%s2] sm:$0x3]
    %v67 = vperm.slane %v65, 0
    %v68 = vperm.slane %v65, 1
    %v87 = vunpack.c.l.b16 %v28
    %v88 = vunpack.c.h.b16 %v28
    %v89 = vunpack.c.l.b16 %v29
    %v90 = vunpack.c.h.b16 %v29
    %v91 = vunpack.c.l.b16 %v30
    %v92 = vunpack.c.h.b16 %v30
    %v93 = vunpack.c.l.b16 %v31
    %v94 = vunpack.c.h.b16 %v31
    %v95 = vunpack.c.l.b16 %v32
    %v96 = vunpack.c.h.b16 %v32
    %v97 = vunpack.c.l.b16 %v33
    %v98 = vunpack.c.h.b16 %v33
    %v99 = vunpack.c.l.b16 %v34
    %v100 = vunpack.c.h.b16 %v34
    %v101 = vunpack.c.l.b16 %v35
    %v102 = vunpack.c.h.b16 %v35
    %v103 = vunpack.c.l.b16 %v36
    %v104 = vunpack.c.h.b16 %v36
    %v105 = vunpack.c.l.b16 %v37
    %v106 = vunpack.c.h.b16 %v37
    %v107 = vunpack.c.l.b16 %v38
    %v108 = vunpack.c.h.b16 %v38
    %v109 = vunpack.c.l.b16 %v39
    %v110 = vunpack.c.h.b16 %v39
    %v111 = vunpack.c.l.b16 %v40
    %v112 = vunpack.c.h.b16 %v40
    %v113 = vunpack.c.l.b16 %v41
    %v114 = vunpack.c.h.b16 %v41
    %v115 = vunpack.c.l.b16 %v42
    %v116 = vunpack.c.h.b16 %v42
    %v117 = vunpack.c.l.b16 %v43
    %v118 = vunpack.c.h.b16 %v43
    %v119 = vpack.c.b16 %v89, %v87
    %v120 = vpack.c.b16 %v90, %v88
    %v121 = vpack.c.b16 %v93, %v91
    %v122 = vpack.c.b16 %v94, %v92
    %v123 = vpack.c.b16 %v97, %v95
    %v124 = vpack.c.b16 %v98, %v96
    %v125 = vpack.c.b16 %v101, %v99
    %v126 = vpack.c.b16 %v102, %v100
    %v127 = vpack.c.b16 %v105, %v103
    %v128 = vpack.c.b16 %v106, %v104
    %v129 = vpack.c.b16 %v109, %v107
    %v130 = vpack.c.b16 %v110, %v108
    %v131 = vpack.c.b16 %v113, %v111
    %v132 = vpack.c.b16 %v114, %v112
    %v133 = vpack.c.b16 %v117, %v115
    %v134 = vpack.c.b16 %v118, %v116
    %v164 = vunpack.c.l.b16 %v44
    %v165 = vunpack.c.h.b16 %v44
    %v166 = vunpack.c.l.b16 %v45
    %v167 = vunpack.c.h.b16 %v45
    %v168 = vunpack.c.l.b16 %v46
    %v169 = vunpack.c.h.b16 %v46
    %v170 = vunpack.c.l.b16 %v47
    %v171 = vunpack.c.h.b16 %v47
    %v172 = vunpack.c.l.b16 %v48
    %v173 = vunpack.c.h.b16 %v48
    %v174 = vunpack.c.l.b16 %v49
    %v175 = vunpack.c.h.b16 %v49
    %v176 = vunpack.c.l.b16 %v50
    %v177 = vunpack.c.h.b16 %v50
    %v178 = vunpack.c.l.b16 %v51
    %v179 = vunpack.c.h.b16 %v51
    %v180 = vunpack.c.l.b16 %v52
    %v181 = vunpack.c.h.b16 %v52
    %v182 = vunpack.c.l.b16 %v53
    %v183 = vunpack.c.h.b16 %v53
    %v184 = vunpack.c.l.b16 %v54
    %v185 = vunpack.c.h.b16 %v54
    %v186 = vunpack.c.l.b16 %v55
    %v187 = vunpack.c.h.b16 %v55
    %v188 = vunpack.c.l.b16 %v56
    %v189 = vunpack.c.h.b16 %v56
    %v190 = vunpack.c.l.b16 %v57
    %v191 = vunpack.c.h.b16 %v57
    %v192 = vunpack.c.l.b16 %v58
    %v193 = vunpack.c.h.b16 %v58
    %v194 = vunpack.c.l.b16 %v59
    %v195 = vunpack.c.h.b16 %v59
    %v196 = vunpack.c.l.b16 %v60
    %v197 = vunpack.c.h.b16 %v60
    %v198 = vunpack.c.l.b16 %v61
    %v199 = vunpack.c.h.b16 %v61
    %v200 = vunpack.c.l.b16 %v62
    %v201 = vunpack.c.h.b16 %v62
    %v202 = vunpack.c.l.b16 %v63
    %v203 = vunpack.c.h.b16 %v63
    %v204 = vunpack.c.l.b16 %v64
    %v205 = vunpack.c.h.b16 %v64
    %v206 = vpack.c.b16 %v166, %v164
    %v207 = vpack.c.b16 %v167, %v165
    %v208 = vpack.c.b16 %v170, %v168
    %v209 = vpack.c.b16 %v171, %v169
    %v210 = vpack.c.b16 %v174, %v172
    %v211 = vpack.c.b16 %v175, %v173
    %v212 = vpack.c.b16 %v178, %v176
    %v213 = vpack.c.b16 %v179, %v177
    %v214 = vpack.c.b16 %v182, %v180
    %v215 = vpack.c.b16 %v183, %v181
    %v216 = vpack.c.b16 %v186, %v184
    %v217 = vpack.c.b16 %v187, %v185
    %v218 = vpack.c.b16 %v190, %v188
    %v219 = vpack.c.b16 %v191, %v189
    %v220 = vpack.c.b16 %v194, %v192
    %v221 = vpack.c.b16 %v195, %v193
    %v222 = vpack.c.b16 %v198, %v196
    %v223 = vpack.c.b16 %v199, %v197
    %v224 = vpack.c.b16 %v202, %v200
    %v225 = vpack.c.b16 %v203, %v201
    %v226 = vpack.c.b16 %v204, %v204
    %v227 = vpack.c.b16 %v205, %v205
    %vm248 = vcmask 326656
    %v250 = vsel %vm248, %v120, 0
    %v253 = vsel %vm248, %v122, 0
    %v256 = vsel %vm248, %v124, 0
    %v259 = vsel %vm248, %v126, 0
    %v262 = vsel %vm248, %v128, 0
    %v265 = vsel %vm248, %v130, 0
    %v268 = vsel %vm248, %v132, 0
    %v271 = vsel %vm248, %v134, 0
    %vm273 = vcmask 1043456
    %v275 = vsel %vm273, %v226, 0
    %v278 = vsel %vm273, %v227, 0
    %280 = vmatpush.bf16.msra.mxu0 %v220
    %281 = vmatpush.bf16.msra.mxu0 %v218
    %282 = vmatpush.bf16.msra.mxu0 %v216
    %283 = vmatpush.bf16.msra.mxu0 %v214
    %284 = vmatpush.bf16.msra.mxu0 %v212
    %285 = vmatpush.bf16.msra.mxu0 %v210
    %286 = vmatpush.bf16.msra.mxu0 %v208
    %287 = vmatpush.bf16.msra.mxu0 %v206
    %288 = vmatmul.bf16.gmra.mxu0 %v119
    %v289 = vpop.f32.mrf.mxu0
    %v290 = vadd.f32 %v67, %v289
    %v291 = vpop.f32.mrf.mxu0
    %v292 = vadd.f32 %v67, %v291
    %293 = vmatmul.bf16.gmra.mxu0 %v121
    %v294 = vpop.f32.mrf.mxu0
    %v295 = vadd.f32 %v67, %v294
    %v296 = vpop.f32.mrf.mxu0
    %v297 = vadd.f32 %v67, %v296
    %298 = vmatmul.bf16.gmra.mxu0 %v123
    %v299 = vpop.f32.mrf.mxu0
    %v300 = vadd.f32 %v67, %v299
    %v301 = vpop.f32.mrf.mxu0
    %v302 = vadd.f32 %v67, %v301
    %303 = vmatmul.bf16.gmra.mxu0 %v125
    %v304 = vpop.f32.mrf.mxu0
    %v305 = vadd.f32 %v67, %v304
    %v306 = vpop.f32.mrf.mxu0
    %v307 = vadd.f32 %v67, %v306
    %308 = vmatmul.bf16.gmra.mxu0 %v127
    %v309 = vpop.f32.mrf.mxu0
    %v310 = vadd.f32 %v67, %v309
    %v311 = vpop.f32.mrf.mxu0
    %v312 = vadd.f32 %v67, %v311
    %313 = vmatmul.bf16.gmra.mxu0 %v129
    %v314 = vpop.f32.mrf.mxu0
    %v315 = vadd.f32 %v67, %v314
    %v316 = vpop.f32.mrf.mxu0
    %v317 = vadd.f32 %v67, %v316
    %318 = vmatmul.bf16.gmra.mxu0 %v131
    %v319 = vpop.f32.mrf.mxu0
    %v320 = vadd.f32 %v67, %v319
    %v321 = vpop.f32.mrf.mxu0
    %v322 = vadd.f32 %v67, %v321
    %323 = vmatmul.bf16.gmra.mxu0 %v133
    %v324 = vpop.f32.mrf.mxu0
    %v325 = vadd.f32 %v67, %v324
    %v326 = vpop.f32.mrf.mxu0
    %v327 = vadd.f32 %v67, %v326
    %328 = vdwg.mxu0
    %329 = vmatpush.bf16.msra.mxu0 0
    %330 = vmatpush.bf16.msra.mxu0 0
    %331 = vmatpush.bf16.msra.mxu0 0
    %332 = vmatpush.bf16.msra.mxu0 0
    %333 = vmatpush.bf16.msra.mxu0 0
    %334 = vmatpush.bf16.msra.mxu0 %v275
    %335 = vmatpush.bf16.msra.mxu0 %v224
    %336 = vmatpush.bf16.msra.mxu0 %v222
    %337 = vmatmul.bf16.gmra.mxu0 %v250
    %v338 = vpop.f32.mrf.mxu0
    %v339 = vadd.f32 %v290, %v338
    %v340 = vpop.f32.mrf.mxu0
    %v341 = vadd.f32 %v292, %v340
    %342 = vmatmul.bf16.gmra.mxu0 %v253
    %v343 = vpop.f32.mrf.mxu0
    %v344 = vadd.f32 %v295, %v343
    %v345 = vpop.f32.mrf.mxu0
    %v346 = vadd.f32 %v297, %v345
    %347 = vmatmul.bf16.gmra.mxu0 %v256
    %v348 = vpop.f32.mrf.mxu0
    %v349 = vadd.f32 %v300, %v348
    %v350 = vpop.f32.mrf.mxu0
    %v351 = vadd.f32 %v302, %v350
    %352 = vmatmul.bf16.gmra.mxu0 %v259
    %v353 = vpop.f32.mrf.mxu0
    %v354 = vadd.f32 %v305, %v353
    %v355 = vpop.f32.mrf.mxu0
    %v356 = vadd.f32 %v307, %v355
    %357 = vmatmul.bf16.gmra.mxu0 %v262
    %v358 = vpop.f32.mrf.mxu0
    %v359 = vadd.f32 %v310, %v358
    %v360 = vpop.f32.mrf.mxu0
    %v361 = vadd.f32 %v312, %v360
    %362 = vmatmul.bf16.gmra.mxu0 %v265
    %v363 = vpop.f32.mrf.mxu0
    %v364 = vadd.f32 %v315, %v363
    %v365 = vpop.f32.mrf.mxu0
    %v366 = vadd.f32 %v317, %v365
    %367 = vmatmul.bf16.gmra.mxu0 %v268
    %v368 = vpop.f32.mrf.mxu0
    %v369 = vadd.f32 %v320, %v368
    %v370 = vpop.f32.mrf.mxu0
    %v371 = vadd.f32 %v322, %v370
    %372 = vmatmul.bf16.gmra.mxu0 %v271
    %v373 = vpop.f32.mrf.mxu0
    %v374 = vadd.f32 %v325, %v373
    %v375 = vpop.f32.mrf.mxu0
    %v376 = vadd.f32 %v327, %v375
    %377 = vdwg.mxu0
    %378 = vmatpush.bf16.msra.mxu0 %v221
    %379 = vmatpush.bf16.msra.mxu0 %v219
    %380 = vmatpush.bf16.msra.mxu0 %v217
    %381 = vmatpush.bf16.msra.mxu0 %v215
    %382 = vmatpush.bf16.msra.mxu0 %v213
    %383 = vmatpush.bf16.msra.mxu0 %v211
    %384 = vmatpush.bf16.msra.mxu0 %v209
    %385 = vmatpush.bf16.msra.mxu0 %v207
    %386 = vmatmul.bf16.gmra.mxu0 %v119
    %v387 = vpop.f32.mrf.mxu0
    %v388 = vadd.f32 %v68, %v387
    %v389 = vpop.f32.mrf.mxu0
    %v390 = vadd.f32 %v68, %v389
    %391 = vmatmul.bf16.gmra.mxu0 %v121
    %v392 = vpop.f32.mrf.mxu0
    %v393 = vadd.f32 %v68, %v392
    %v394 = vpop.f32.mrf.mxu0
    %v395 = vadd.f32 %v68, %v394
    %396 = vmatmul.bf16.gmra.mxu0 %v123
    %v397 = vpop.f32.mrf.mxu0
    %v398 = vadd.f32 %v68, %v397
    %v399 = vpop.f32.mrf.mxu0
    %v400 = vadd.f32 %v68, %v399
    %401 = vmatmul.bf16.gmra.mxu0 %v125
    %v402 = vpop.f32.mrf.mxu0
    %v403 = vadd.f32 %v68, %v402
    %v404 = vpop.f32.mrf.mxu0
    %v405 = vadd.f32 %v68, %v404
    %406 = vmatmul.bf16.gmra.mxu0 %v127
    %v407 = vpop.f32.mrf.mxu0
    %v408 = vadd.f32 %v68, %v407
    %v409 = vpop.f32.mrf.mxu0
    %v410 = vadd.f32 %v68, %v409
    %411 = vmatmul.bf16.gmra.mxu0 %v129
    %v412 = vpop.f32.mrf.mxu0
    %v413 = vadd.f32 %v68, %v412
    %v414 = vpop.f32.mrf.mxu0
    %v415 = vadd.f32 %v68, %v414
    %416 = vmatmul.bf16.gmra.mxu0 %v131
    %v417 = vpop.f32.mrf.mxu0
    %v418 = vadd.f32 %v68, %v417
    %v419 = vpop.f32.mrf.mxu0
    %v420 = vadd.f32 %v68, %v419
    %421 = vmatmul.bf16.gmra.mxu0 %v133
    %v422 = vpop.f32.mrf.mxu0
    %v423 = vadd.f32 %v68, %v422
    %v424 = vpop.f32.mrf.mxu0
    %v425 = vadd.f32 %v68, %v424
    %426 = vdwg.mxu0
    %427 = vmatpush.bf16.msra.mxu0 0
    %428 = vmatpush.bf16.msra.mxu0 0
    %429 = vmatpush.bf16.msra.mxu0 0
    %430 = vmatpush.bf16.msra.mxu0 0
    %431 = vmatpush.bf16.msra.mxu0 0
    %432 = vmatpush.bf16.msra.mxu0 %v278
    %433 = vmatpush.bf16.msra.mxu0 %v225
    %434 = vmatpush.bf16.msra.mxu0 %v223
    %435 = vmatmul.bf16.gmra.mxu0 %v250
    %v436 = vpop.f32.mrf.mxu0
    %v437 = vadd.f32 %v388, %v436
    %v438 = vpop.f32.mrf.mxu0
    %v439 = vadd.f32 %v390, %v438
    %440 = vmatmul.bf16.gmra.mxu0 %v253
    %v441 = vpop.f32.mrf.mxu0
    %v442 = vadd.f32 %v393, %v441
    %v443 = vpop.f32.mrf.mxu0
    %v444 = vadd.f32 %v395, %v443
    %445 = vmatmul.bf16.gmra.mxu0 %v256
    %v446 = vpop.f32.mrf.mxu0
    %v447 = vadd.f32 %v398, %v446
    %v448 = vpop.f32.mrf.mxu0
    %v449 = vadd.f32 %v400, %v448
    %450 = vmatmul.bf16.gmra.mxu0 %v259
    %v451 = vpop.f32.mrf.mxu0
    %v452 = vadd.f32 %v403, %v451
    %v453 = vpop.f32.mrf.mxu0
    %v454 = vadd.f32 %v405, %v453
    %455 = vmatmul.bf16.gmra.mxu0 %v262
    %v456 = vpop.f32.mrf.mxu0
    %v457 = vadd.f32 %v408, %v456
    %v458 = vpop.f32.mrf.mxu0
    %v459 = vadd.f32 %v410, %v458
    %460 = vmatmul.bf16.gmra.mxu0 %v265
    %v461 = vpop.f32.mrf.mxu0
    %v462 = vadd.f32 %v413, %v461
    %v463 = vpop.f32.mrf.mxu0
    %v464 = vadd.f32 %v415, %v463
    %465 = vmatmul.bf16.gmra.mxu0 %v268
    %v466 = vpop.f32.mrf.mxu0
    %v467 = vadd.f32 %v418, %v466
    %v468 = vpop.f32.mrf.mxu0
    %v469 = vadd.f32 %v420, %v468
    %470 = vmatmul.bf16.gmra.mxu0 %v271
    %v471 = vpop.f32.mrf.mxu0
    %v472 = vadd.f32 %v423, %v471
    %v473 = vpop.f32.mrf.mxu0
    %v474 = vadd.f32 %v425, %v473
    %475 = vdwg.mxu0
    %vm476 = vcmp.gt.f32.partialorder %v339, 0.0
    %vm477 = vcmp.gt.f32.partialorder %v437, 0.0
    %vm478 = vcmp.gt.f32.partialorder %v341, 0.0
    %vm479 = vcmp.gt.f32.partialorder %v439, 0.0
    %vm480 = vcmp.gt.f32.partialorder %v344, 0.0
    %vm481 = vcmp.gt.f32.partialorder %v442, 0.0
    %vm482 = vcmp.gt.f32.partialorder %v346, 0.0
    %vm483 = vcmp.gt.f32.partialorder %v444, 0.0
    %vm484 = vcmp.gt.f32.partialorder %v349, 0.0
    %vm485 = vcmp.gt.f32.partialorder %v447, 0.0
    %vm486 = vcmp.gt.f32.partialorder %v351, 0.0
    %vm487 = vcmp.gt.f32.partialorder %v449, 0.0
    %vm488 = vcmp.gt.f32.partialorder %v354, 0.0
    %vm489 = vcmp.gt.f32.partialorder %v452, 0.0
    %vm490 = vcmp.gt.f32.partialorder %v356, 0.0
    %vm491 = vcmp.gt.f32.partialorder %v454, 0.0
    %vm492 = vcmp.gt.f32.partialorder %v359, 0.0
    %vm493 = vcmp.gt.f32.partialorder %v457, 0.0
    %vm494 = vcmp.gt.f32.partialorder %v361, 0.0
    %vm495 = vcmp.gt.f32.partialorder %v459, 0.0
    %vm496 = vcmp.gt.f32.partialorder %v364, 0.0
    %vm497 = vcmp.gt.f32.partialorder %v462, 0.0
    %vm498 = vcmp.gt.f32.partialorder %v366, 0.0
    %vm499 = vcmp.gt.f32.partialorder %v464, 0.0
    %vm500 = vcmp.gt.f32.partialorder %v369, 0.0
    %vm501 = vcmp.gt.f32.partialorder %v467, 0.0
    %vm502 = vcmp.gt.f32.partialorder %v371, 0.0
    %vm503 = vcmp.gt.f32.partialorder %v469, 0.0
    %vm504 = vcmp.gt.f32.partialorder %v374, 0.0
    %vm505 = vcmp.gt.f32.partialorder %v472, 0.0
    %vm506 = vcmp.gt.f32.partialorder %v376, 0.0
    %vm507 = vcmp.gt.f32.partialorder %v474, 0.0
    %v508 = vmul.f32 %v339, 0.01
    %v509 = vmul.f32 %v437, 0.01
    %v510 = vmul.f32 %v341, 0.01
    %v511 = vmul.f32 %v439, 0.01
    %v512 = vmul.f32 %v344, 0.01
    %v513 = vmul.f32 %v442, 0.01
    %v514 = vmul.f32 %v346, 0.01
    %v515 = vmul.f32 %v444, 0.01
    %v516 = vmul.f32 %v349, 0.01
    %v517 = vmul.f32 %v447, 0.01
    %v518 = vmul.f32 %v351, 0.01
    %v519 = vmul.f32 %v449, 0.01
    %v520 = vmul.f32 %v354, 0.01
    %v521 = vmul.f32 %v452, 0.01
    %v522 = vmul.f32 %v356, 0.01
    %v523 = vmul.f32 %v454, 0.01
    %v524 = vmul.f32 %v359, 0.01
    %v525 = vmul.f32 %v457, 0.01
    %v526 = vmul.f32 %v361, 0.01
    %v527 = vmul.f32 %v459, 0.01
    %v528 = vmul.f32 %v364, 0.01
    %v529 = vmul.f32 %v462, 0.01
    %v530 = vmul.f32 %v366, 0.01
    %v531 = vmul.f32 %v464, 0.01
    %v532 = vmul.f32 %v369, 0.01
    %v533 = vmul.f32 %v467, 0.01
    %v534 = vmul.f32 %v371, 0.01
    %v535 = vmul.f32 %v469, 0.01
    %v536 = vmul.f32 %v374, 0.01
    %v537 = vmul.f32 %v472, 0.01
    %v538 = vmul.f32 %v376, 0.01
    %v539 = vmul.f32 %v474, 0.01
    %v540 = vsel %vm476, %v339, %v508
    %v541 = vsel %vm477, %v437, %v509
    %v542 = vsel %vm478, %v341, %v510
    %v543 = vsel %vm479, %v439, %v511
    %v544 = vsel %vm480, %v344, %v512
    %v545 = vsel %vm481, %v442, %v513
    %v546 = vsel %vm482, %v346, %v514
    %v547 = vsel %vm483, %v444, %v515
    %v548 = vsel %vm484, %v349, %v516
    %v549 = vsel %vm485, %v447, %v517
    %v550 = vsel %vm486, %v351, %v518
    %v551 = vsel %vm487, %v449, %v519
    %v552 = vsel %vm488, %v354, %v520
    %v553 = vsel %vm489, %v452, %v521
    %v554 = vsel %vm490, %v356, %v522
    %v555 = vsel %vm491, %v454, %v523
    %v556 = vsel %vm492, %v359, %v524
    %v557 = vsel %vm493, %v457, %v525
    %v558 = vsel %vm494, %v361, %v526
    %v559 = vsel %vm495, %v459, %v527
    %v560 = vsel %vm496, %v364, %v528
    %v561 = vsel %vm497, %v462, %v529
    %v562 = vsel %vm498, %v366, %v530
    %v563 = vsel %vm499, %v464, %v531
    %v564 = vsel %vm500, %v369, %v532
    %v565 = vsel %vm501, %v467, %v533
    %v566 = vsel %vm502, %v371, %v534
    %v567 = vsel %vm503, %v469, %v535
    %v568 = vsel %vm504, %v374, %v536
    %v569 = vsel %vm505, %v472, %v537
    %v570 = vsel %vm506, %v376, %v538
    %v571 = vsel %vm507, %v474, %v539
    %v572 = vpack.c.bf16 %v542, %v540
    %v573 = vpack.c.bf16 %v543, %v541
    %v574 = vpack.c.bf16 %v546, %v544
    %v575 = vpack.c.bf16 %v547, %v545
    %v576 = vpack.c.bf16 %v550, %v548
    %v577 = vpack.c.bf16 %v551, %v549
    %v578 = vpack.c.bf16 %v554, %v552
    %v579 = vpack.c.bf16 %v555, %v553
    %v580 = vpack.c.bf16 %v558, %v556
    %v581 = vpack.c.bf16 %v559, %v557
    %v582 = vpack.c.bf16 %v562, %v560
    %v583 = vpack.c.bf16 %v563, %v561
    %v584 = vpack.c.bf16 %v566, %v564
    %v585 = vpack.c.bf16 %v567, %v565
    %v586 = vpack.c.bf16 %v570, %v568
    %v587 = vpack.c.bf16 %v571, %v569
    %v588 = vld [vmem:[%s3] sm:$0xf]
    %v589 = vld [vmem:[%s3 + $0x4] sm:$0xf]
    %v590 = vld [vmem:[%s3 + $0x8] sm:$0xf]
    %v591 = vld [vmem:[%s3 + $0xc] sm:$0xf]
    %v592 = vld [vmem:[%s3 + $0x10] sm:$0xf]
    %v593 = vld [vmem:[%s3 + $0x14] sm:$0xf]
    %v594 = vld [vmem:[%s3 + $0x18] sm:$0xf]
    %v595 = vld [vmem:[%s3 + $0x1c] sm:$0xf]
    %v596 = vld [vmem:[%s3 + $0x20] sm:$0xf]
    %v597 = vld [vmem:[%s3 + $0x24] sm:$0xf]
    %v598 = vld [vmem:[%s3 + $0x28] sm:$0xf]
    %v599 = vld [vmem:[%s3 + $0x2c] sm:$0xf]
    %v600 = vld [vmem:[%s3 + $0x30] sm:$0xf]
    %v601 = vld [vmem:[%s3 + $0x34] sm:$0xf]
    %v602 = vld [vmem:[%s3 + $0x38] sm:$0xf]
    %v603 = vld [vmem:[%s3 + $0x3c] sm:$0xf]
    %v604 = vld [vmem:[%s3 + $0x40] sm:$0xf]
    %v605 = vld [vmem:[%s3 + $0x44] sm:$0xf]
    %v606 = vld [vmem:[%s3 + $0x48] sm:$0xf]
    %v607 = vld [vmem:[%s3 + $0x4c] sm:$0xf]
    %v608 = vld [vmem:[%s3 + $0x50] sm:$0xf]
    %v609 = vld [vmem:[%s3 + $0x54] sm:$0xf]
    %v610 = vld [vmem:[%s3 + $0x58] sm:$0xf]
    %v611 = vld [vmem:[%s3 + $0x5c] sm:$0xf]
    %v612 = vld [vmem:[%s3 + $0x60] sm:$0xf]
    %v613 = vld [vmem:[%s3 + $0x64] sm:$0xf]
    %v614 = vld [vmem:[%s3 + $0x68] sm:$0xf]
    %v615 = vld [vmem:[%s3 + $0x6c] sm:$0xf]
    %v616 = vld [vmem:[%s3 + $0x70] sm:$0xf]
    %v617 = vld [vmem:[%s3 + $0x74] sm:$0xf]
    %v618 = vld [vmem:[%s3 + $0x78] sm:$0xf]
    %v619 = vld [vmem:[%s3 + $0x7c] sm:$0xf]
    %v620 = vld [vmem:[%s4] sm:$0x1]
    %v622 = vperm.slane %v620, 0
    %v656 = vunpack.c.l.b16 %v588
    %v657 = vunpack.c.l.b16 %v589
    %v658 = vunpack.c.l.b16 %v590
    %v659 = vunpack.c.l.b16 %v591
    %v660 = vunpack.c.l.b16 %v592
    %v661 = vunpack.c.l.b16 %v593
    %v662 = vunpack.c.l.b16 %v594
    %v663 = vunpack.c.l.b16 %v595
    %v664 = vunpack.c.l.b16 %v596
    %v665 = vunpack.c.l.b16 %v597
    %v666 = vunpack.c.l.b16 %v598
    %v667 = vunpack.c.l.b16 %v599
    %v668 = vunpack.c.l.b16 %v600
    %v669 = vunpack.c.l.b16 %v601
    %v670 = vunpack.c.l.b16 %v602
    %v671 = vunpack.c.l.b16 %v603
    %v672 = vunpack.c.l.b16 %v604
    %v673 = vunpack.c.l.b16 %v605
    %v674 = vunpack.c.l.b16 %v606
    %v675 = vunpack.c.l.b16 %v607
    %v676 = vunpack.c.l.b16 %v608
    %v677 = vunpack.c.l.b16 %v609
    %v678 = vunpack.c.l.b16 %v610
    %v679 = vunpack.c.l.b16 %v611
    %v680 = vunpack.c.l.b16 %v612
    %v681 = vunpack.c.l.b16 %v613
    %v682 = vunpack.c.l.b16 %v614
    %v683 = vunpack.c.l.b16 %v615
    %v684 = vunpack.c.l.b16 %v616
    %v685 = vunpack.c.l.b16 %v617
    %v686 = vunpack.c.l.b16 %v618
    %v687 = vunpack.c.l.b16 %v619
    %v688 = vpack.c.b16 %v657, %v656
    %v689 = vpack.c.b16 %v659, %v658
    %v690 = vpack.c.b16 %v661, %v660
    %v691 = vpack.c.b16 %v663, %v662
    %v692 = vpack.c.b16 %v665, %v664
    %v693 = vpack.c.b16 %v667, %v666
    %v694 = vpack.c.b16 %v669, %v668
    %v695 = vpack.c.b16 %v671, %v670
    %v696 = vpack.c.b16 %v673, %v672
    %v697 = vpack.c.b16 %v675, %v674
    %v698 = vpack.c.b16 %v677, %v676
    %v699 = vpack.c.b16 %v679, %v678
    %v700 = vpack.c.b16 %v681, %v680
    %v701 = vpack.c.b16 %v683, %v682
    %v702 = vpack.c.b16 %v685, %v684
    %v703 = vpack.c.b16 %v687, %v686
    %720 = vmatpush.bf16.msra.mxu0 %v695
    %721 = vmatpush.bf16.msra.mxu0 %v694
    %722 = vmatpush.bf16.msra.mxu0 %v693
    %723 = vmatpush.bf16.msra.mxu0 %v692
    %724 = vmatpush.bf16.msra.mxu0 %v691
    %725 = vmatpush.bf16.msra.mxu0 %v690
    %726 = vmatpush.bf16.msra.mxu0 %v689
    %727 = vmatpush.bf16.msra.mxu0 %v688
    %728 = vmatmul.bf16.gmra.mxu0 %v572
    %v729 = vpop.f32.mrf.mxu0
    %v730 = vadd.f32 %v622, %v729
    %v731 = vpop.f32.mrf.mxu0
    %v732 = vadd.f32 %v622, %v731
    %733 = vmatmul.bf16.gmra.mxu0 %v574
    %v734 = vpop.f32.mrf.mxu0
    %v735 = vadd.f32 %v622, %v734
    %v736 = vpop.f32.mrf.mxu0
    %v737 = vadd.f32 %v622, %v736
    %738 = vmatmul.bf16.gmra.mxu0 %v576
    %v739 = vpop.f32.mrf.mxu0
    %v740 = vadd.f32 %v622, %v739
    %v741 = vpop.f32.mrf.mxu0
    %v742 = vadd.f32 %v622, %v741
    %743 = vmatmul.bf16.gmra.mxu0 %v578
    %v744 = vpop.f32.mrf.mxu0
    %v745 = vadd.f32 %v622, %v744
    %v746 = vpop.f32.mrf.mxu0
    %v747 = vadd.f32 %v622, %v746
    %748 = vmatmul.bf16.gmra.mxu0 %v580
    %v749 = vpop.f32.mrf.mxu0
    %v750 = vadd.f32 %v622, %v749
    %v751 = vpop.f32.mrf.mxu0
    %v752 = vadd.f32 %v622, %v751
    %753 = vmatmul.bf16.gmra.mxu0 %v582
    %v754 = vpop.f32.mrf.mxu0
    %v755 = vadd.f32 %v622, %v754
    %v756 = vpop.f32.mrf.mxu0
    %v757 = vadd.f32 %v622, %v756
    %758 = vmatmul.bf16.gmra.mxu0 %v584
    %v759 = vpop.f32.mrf.mxu0
    %v760 = vadd.f32 %v622, %v759
    %v761 = vpop.f32.mrf.mxu0
    %v762 = vadd.f32 %v622, %v761
    %763 = vmatmul.bf16.gmra.mxu0 %v586
    %v764 = vpop.f32.mrf.mxu0
    %v765 = vadd.f32 %v622, %v764
    %v766 = vpop.f32.mrf.mxu0
    %v767 = vadd.f32 %v622, %v766
    %768 = vdwg.mxu0
    %769 = vmatpush.bf16.msra.mxu0 %v703
    %770 = vmatpush.bf16.msra.mxu0 %v702
    %771 = vmatpush.bf16.msra.mxu0 %v701
    %772 = vmatpush.bf16.msra.mxu0 %v700
    %773 = vmatpush.bf16.msra.mxu0 %v699
    %774 = vmatpush.bf16.msra.mxu0 %v698
    %775 = vmatpush.bf16.msra.mxu0 %v697
    %776 = vmatpush.bf16.msra.mxu0 %v696
    %777 = vmatmul.bf16.gmra.mxu0 %v573
    %v778 = vpop.f32.mrf.mxu0
    %v779 = vadd.f32 %v730, %v778
    %v780 = vpop.f32.mrf.mxu0
    %v781 = vadd.f32 %v732, %v780
    %782 = vmatmul.bf16.gmra.mxu0 %v575
    %v783 = vpop.f32.mrf.mxu0
    %v784 = vadd.f32 %v735, %v783
    %v785 = vpop.f32.mrf.mxu0
    %v786 = vadd.f32 %v737, %v785
    %787 = vmatmul.bf16.gmra.mxu0 %v577
    %v788 = vpop.f32.mrf.mxu0
    %v789 = vadd.f32 %v740, %v788
    %v790 = vpop.f32.mrf.mxu0
    %v791 = vadd.f32 %v742, %v790
    %792 = vmatmul.bf16.gmra.mxu0 %v579
    %v793 = vpop.f32.mrf.mxu0
    %v794 = vadd.f32 %v745, %v793
    %v795 = vpop.f32.mrf.mxu0
    %v796 = vadd.f32 %v747, %v795
    %797 = vmatmul.bf16.gmra.mxu0 %v581
    %v798 = vpop.f32.mrf.mxu0
    %v799 = vadd.f32 %v750, %v798
    %v800 = vpop.f32.mrf.mxu0
    %v801 = vadd.f32 %v752, %v800
    %802 = vmatmul.bf16.gmra.mxu0 %v583
    %v803 = vpop.f32.mrf.mxu0
    %v804 = vadd.f32 %v755, %v803
    %v805 = vpop.f32.mrf.mxu0
    %v806 = vadd.f32 %v757, %v805
    %807 = vmatmul.bf16.gmra.mxu0 %v585
    %v808 = vpop.f32.mrf.mxu0
    %v809 = vadd.f32 %v760, %v808
    %v810 = vpop.f32.mrf.mxu0
    %v811 = vadd.f32 %v762, %v810
    %812 = vmatmul.bf16.gmra.mxu0 %v587
    %v813 = vpop.f32.mrf.mxu0
    %v814 = vadd.f32 %v765, %v813
    %v815 = vpop.f32.mrf.mxu0
    %v816 = vadd.f32 %v767, %v815
    %817 = vdwg.mxu0
    %vm818 = vcmp.gt.f32.partialorder %v779, 0.0
    %vm819 = vcmp.gt.f32.partialorder %v781, 0.0
    %vm820 = vcmp.gt.f32.partialorder %v784, 0.0
    %vm821 = vcmp.gt.f32.partialorder %v786, 0.0
    %vm822 = vcmp.gt.f32.partialorder %v789, 0.0
    %vm823 = vcmp.gt.f32.partialorder %v791, 0.0
    %vm824 = vcmp.gt.f32.partialorder %v794, 0.0
    %vm825 = vcmp.gt.f32.partialorder %v796, 0.0
    %vm826 = vcmp.gt.f32.partialorder %v799, 0.0
    %vm827 = vcmp.gt.f32.partialorder %v801, 0.0
    %vm828 = vcmp.gt.f32.partialorder %v804, 0.0
    %vm829 = vcmp.gt.f32.partialorder %v806, 0.0
    %vm830 = vcmp.gt.f32.partialorder %v809, 0.0
    %vm831 = vcmp.gt.f32.partialorder %v811, 0.0
    %vm832 = vcmp.gt.f32.partialorder %v814, 0.0
    %vm833 = vcmp.gt.f32.partialorder %v816, 0.0
    %v834 = vmul.f32 %v779, 0.01
    %v835 = vmul.f32 %v781, 0.01
    %v836 = vmul.f32 %v784, 0.01
    %v837 = vmul.f32 %v786, 0.01
    %v838 = vmul.f32 %v789, 0.01
    %v839 = vmul.f32 %v791, 0.01
    %v840 = vmul.f32 %v794, 0.01
    %v841 = vmul.f32 %v796, 0.01
    %v842 = vmul.f32 %v799, 0.01
    %v843 = vmul.f32 %v801, 0.01
    %v844 = vmul.f32 %v804, 0.01
    %v845 = vmul.f32 %v806, 0.01
    %v846 = vmul.f32 %v809, 0.01
    %v847 = vmul.f32 %v811, 0.01
    %v848 = vmul.f32 %v814, 0.01
    %v849 = vmul.f32 %v816, 0.01
    %v850 = vsel %vm818, %v779, %v834
    %v851 = vsel %vm819, %v781, %v835
    %v852 = vsel %vm820, %v784, %v836
    %v853 = vsel %vm821, %v786, %v837
    %v854 = vsel %vm822, %v789, %v838
    %v855 = vsel %vm823, %v791, %v839
    %v856 = vsel %vm824, %v794, %v840
    %v857 = vsel %vm825, %v796, %v841
    %v858 = vsel %vm826, %v799, %v842
    %v859 = vsel %vm827, %v801, %v843
    %v860 = vsel %vm828, %v804, %v844
    %v861 = vsel %vm829, %v806, %v845
    %v862 = vsel %vm830, %v809, %v846
    %v863 = vsel %vm831, %v811, %v847
    %v864 = vsel %vm832, %v814, %v848
    %v865 = vsel %vm833, %v816, %v849
    %v866 = vld [vmem:[%s5] sm:$0x1]
    %v867 = vpack.c.bf16 %v851, %v850
    %v868 = vpack.c.bf16 %v853, %v852
    %v869 = vpack.c.bf16 %v855, %v854
    %v870 = vpack.c.bf16 %v857, %v856
    %v871 = vpack.c.bf16 %v859, %v858
    %v872 = vpack.c.bf16 %v861, %v860
    %v873 = vpack.c.bf16 %v863, %v862
    %v874 = vpack.c.bf16 %v865, %v864
    %v875 = vld [vmem:[%s6] sm:$0x3]
    %877 = vset.pattern.permute.xlu0 0
    %878 = vperm.xlu0 %877, %v875
    %v879 = vpop.permute.xlu0 %878
    %vm881 = vcmask 523264
    %v883 = vsel %vm881, %v866, 0
    %v886 = vsel %vm881, %v867, 0
    %v889 = vsel %vm881, %v868, 0
    %v892 = vsel %vm881, %v869, 0
    %v895 = vsel %vm881, %v870, 0
    %v898 = vsel %vm881, %v871, 0
    %v901 = vsel %vm881, %v872, 0
    %v904 = vsel %vm881, %v873, 0
    %v907 = vsel %vm881, %v874, 0
    %909 = vmatpush.bf16.xpose.msra.mxu0 %v907
    %910 = vmatpush.bf16.xpose.msra.mxu0 %v904
    %911 = vmatpush.bf16.xpose.msra.mxu0 %v901
    %912 = vmatpush.bf16.xpose.msra.mxu0 %v898
    %913 = vmatpush.bf16.xpose.msra.mxu0 %v895
    %914 = vmatpush.bf16.xpose.msra.mxu0 %v892
    %915 = vmatpush.bf16.xpose.msra.mxu0 %v889
    %916 = vmatpush.bf16.xpose.msra.mxu0 %v886
    %917 = vmatmul.bf16.gmra.mxu0 %v883
    %v918 = vpop.f32.mrf.mxu0
    %v919 = vadd.f32 %v879, %v918
    %v920 = vpop.f32.mrf.mxu0
    %921 = vdwg.mxu0
    %922 = vst [vmem:[#allocation2] sm:$0x3] %v919
    // Predicated region
    $region30: #{tpu_custom_call.1} parent=1 // pred_check
      _
    $region31: #{tpu_custom_call.1} parent=1 // pred_check_branch
      %924 = sbr.rel (0) target = $region33
    $region32: #{tpu_custom_call.1} parent=1 // pred_region
      %926 = vsyncadd [#allocation3], 0
      %s928 = sshll.u32 [#allocation2], 4
      %s929 = int_to_ptr.vmem [resolvable:$true] %s928
      %s930 = sshll.u32 %s7, 4
      %s931 = int_to_ptr.hbm [resolvable:$true] %s930
      %933 = dma.vmem_to_hbm [thread:$0]  %s929, 32, %s931, [#allocation3]
    $region33: #{tpu_custom_call.1} parent=1 // pred_fallthru
      _
    // Predicated region
    $region34: #{tpu_custom_call.1} parent=1 // pred_check
      _
    $region35: #{tpu_custom_call.1} parent=1 // pred_check_branch
      %935 = sbr.rel (0) target = $region37
    $region36: #{tpu_custom_call.1} parent=1 // pred_region
      %937 = dma.done [#allocation3], 32
    $region37: #{tpu_custom_call.1} parent=1 // pred_fallthru
      _
    %938 = vsyncpa [#allocation3], 1

</llo_original>
